<compile_context>
chip_gen: v5e
topology: v5e:2x2
jax: 0.10.0
libtpu: 0.0.40
codegen_flags: <defaults>
</compile_context>

<pallas_src>
import functools
import math

import jax
import jax.numpy as jnp
from jax.experimental import pallas as pl
from jax.experimental.pallas import tpu as pltpu


# ---------------------------------------------------------------------------
# Buffer setup (mirrors PositionalEncoding.__init__) — plain JAX, done once.
# ---------------------------------------------------------------------------
def make_positional_encoding(d_model: int, max_len: int = 5000) -> jax.Array:
    """(max_len, 1, d_model) float32 sinusoidal PE buffer, built like torch."""
    position = jnp.arange(max_len, dtype=jnp.float32)[:, None]              # (L, 1)
    div_term = jnp.exp(
        jnp.arange(0, d_model, 2, dtype=jnp.float32)
        * (-math.log(10000.0) / d_model)
    )                                                                        # (D/2,)
    pe = jnp.zeros((max_len, d_model), dtype=jnp.float32)
    pe = pe.at[:, 0::2].set(jnp.sin(position * div_term))
    pe = pe.at[:, 1::2].set(jnp.cos(position * div_term))
    # unsqueeze(0).transpose(0, 1) -> (max_len, 1, d_model)
    return pe[:, None, :]


# ---------------------------------------------------------------------------
# Kernels
# ---------------------------------------------------------------------------
def _pe_add_lane_dense_kernel(x_ref, pe_ref, o_ref, *, batch: int):
    """Lane-dense path. x_ref/o_ref: (ts, B*D); pe_ref: (ts, D) float32."""
    pe_blk = pe_ref[...]
    if batch > 1:
        # Replicate pe across the batch copies living side-by-side on the lane
        # axis.  Kernel is DMA-bound, so this VPU/XLU work is free filler.
        pe_blk = jnp.tile(pe_blk, (1, batch))
    o_ref[...] = (x_ref[...].astype(jnp.float32) + pe_blk).astype(o_ref.dtype)


def _pe_add_kernel(x_ref, pe_ref, o_ref):
    """Dense path. x_ref/o_ref: (ts, B, D); pe_ref: (ts, 1, D) float32
    (sublane broadcast over the batch axis)."""
    o_ref[...] = (x_ref[...].astype(jnp.float32) + pe_ref[...]).astype(o_ref.dtype)


# ---------------------------------------------------------------------------
# Tile selection helpers
# ---------------------------------------------------------------------------
def _default_target_block_bytes() -> int:
    """Per-x-block VMEM target: ~2 MiB on v5e (16 MiB scoped-VMEM default),
    ~4 MiB on v6e/v7x (32 MiB scoped default; well under v7x's 64 MiB
    physical VMEM with double-buffered x + out blocks)."""
    try:
        kind = jax.devices()[0].device_kind.lower()
    except Exception:
        return 2 * 1024 * 1024
    if "v5 lite" in kind or "v5lite" in kind or "v5e" in kind:
        return 2 * 1024 * 1024
    return 4 * 1024 * 1024


def _choose_seq_tile(S: int, padded_row_bytes: int, pack: int,
                     target_bytes: int, seq_tile, min_steps: int = 2) -> int:
    """Sequence tile derived from the PADDED VMEM footprint of one seq row,
    rounded to the dtype sublane pack, and capped so the grid has at least
    `min_steps` steps (feeds both v7x TensorCores)."""
    if seq_tile is not None:
        ts = int(seq_tile)
        if ts >= S:
            return S
        return max(pack, (ts // pack) * pack)        # keep layout legality
    rows = (target_bytes // max(1, padded_row_bytes)) // pack * pack
    rows = max(pack, rows)
    if min_steps > 1 and S > pack:
        cap = max(pack, pl.cdiv(pl.cdiv(S, min_steps), pack) * pack)
        rows = min(rows, cap)
    return S if rows >= S else int(rows)


# ---------------------------------------------------------------------------
# Forward wrapper
# ---------------------------------------------------------------------------
@functools.partial(
    jax.jit, static_argnames=("seq_tile", "target_block_bytes", "donate_x"))
def positional_encoding_forward(x: jax.Array, pe: jax.Array, *,
                                seq_tile: int | None = None,
                                target_block_bytes: int | None = None,
                                donate_x: bool = False) -> jax.Array:
    """x: (S, B, D); pe: (max_len, 1, D) float32. Returns x + pe[:S] in x.dtype."""
    S, B, D = x.shape
    max_len = pe.shape[0]
    if S > max_len:
        raise ValueError(f"seq_len {S} exceeds positional-encoding max_len {max_len}")
    if pe.shape != (max_len, 1, D):
        raise ValueError(f"pe shape {pe.shape} incompatible with x shape {x.shape}")

    itemsize = jnp.dtype(x.dtype).itemsize
    pack = max(8, 32 // max(1, itemsize))           # sublane pack: 8 f32 / 16 bf16 / 32 i8
    lane_dense = (B < pack) or (D % 128 != 0)
    target = (target_block_bytes if target_block_bytes is not None
              else _default_target_block_bytes())

    # Padded VMEM bytes of ONE seq row of an x block (lanes -> 128, sublanes -> pack).
    if lane_dense:
        n_flat = B * D
        padded_row_bytes = pl.cdiv(n_flat, 128) * 128 * itemsize
    else:
        padded_row_bytes = ((pl.cdiv(B, pack) * pack)
                            * (pl.cdiv(D, 128) * 128) * itemsize)

    ts = _choose_seq_tile(S, padded_row_bytes, pack, target, seq_tile)
    grid = (pl.cdiv(S, ts),)
    params = pltpu.CompilerParams(dimension_semantics=("parallel",))
    aliases = {0: 0} if donate_x else {}

    if lane_dense:
        # Free row-major views under jit; output is lane-dense (full B*D on lanes).
        x2 = x.reshape(S, n_flat)
        pe2 = pe.reshape(max_len, D).astype(jnp.float32)
        if ts == S and (S % 8 != 0):
            # Single block whose sublane dim is not a multiple of 8: make the
            # pe block equal its full array dims (tiny copy, a few KiB).
            pe2 = pe2[:S]
        out2 = pl.pallas_call(
            functools.partial(_pe_add_lane_dense_kernel, batch=B),
            out_shape=jax.ShapeDtypeStruct((S, n_flat), x.dtype),
            grid=grid,
            in_specs=[
                pl.BlockSpec((ts, n_flat), lambda s: (s, 0)),
                # Windows directly into the (max_len, D) buffer == pe[:S] usage.
                pl.BlockSpec((ts, D), lambda s: (s, 0)),
            ],
            out_specs=pl.BlockSpec((ts, n_flat), lambda s: (s, 0)),
            compiler_params=params,
            input_output_aliases=aliases,
        )(x2, pe2)
        return out2.reshape(S, B, D)

    # Already-dense shapes: keep natural (ts, B, D) blocks, sublane-broadcast pe.
    pe_f32 = pe.astype(jnp.float32)
    return pl.pallas_call(
        _pe_add_kernel,
        out_shape=jax.ShapeDtypeStruct((S, B, D), x.dtype),
        grid=grid,
        in_specs=[
            pl.BlockSpec((ts, B, D), lambda s: (s, 0, 0)),
            pl.BlockSpec((ts, 1, D), lambda s: (s, 0, 0)),
        ],
        out_specs=pl.BlockSpec((ts, B, D), lambda s: (s, 0, 0)),
        compiler_params=params,
        input_output_aliases=aliases,
    )(x, pe_f32)


# ---------------------------------------------------------------------------
# Self-test
# ---------------------------------------------------------------------------
if __name__ == "__main__":
    d_model, max_len = 32, 64
    key = jax.random.PRNGKey(0)
    k1, k2, k3 = jax.random.split(key, 3)

    pe = make_positional_encoding(d_model, max_len=max_len)       # (64, 1, 32) f32

    # --- Case 1: narrow shape -> lane-dense (S, B*D) path, single block ------
    S1, B1 = 8, 2
    x1 = jax.random.normal(k1, (S1, B1, d_model), dtype=jnp.float32)
    out1 = jax.block_until_ready(positional_encoding_forward(x1, pe))
    ref1 = x1 + pe[:S1]
    assert out1.shape == x1.shape and out1.dtype == x1.dtype
    assert jnp.allclose(out1, ref1, atol=1e-6, rtol=1e-6)

    # --- Case 2: lane-dense, multi-step grid with ragged last block, donated x
    S2, B2 = 20, 2
    x2 = jax.random.normal(k2, (S2, B2, d_model), dtype=jnp.float32)
    ref2 = x2 + pe[:S2]
    out2 = jax.block_until_ready(
        positional_encoding_forward(x2, pe, seq_tile=8, donate_x=True))
    assert jnp.allclose(out2, ref2, atol=1e-6, rtol=1e-6)

    # --- Case 3: bf16 activations; pe stays f32, add in f32, output bf16 -----
    x3 = x1.astype(jnp.bfloat16)
    out3 = jax.block_until_ready(positional_encoding_forward(x3, pe))
    ref3 = (x3.astype(jnp.float32) + pe[:S1]).astype(jnp.bfloat16)
    assert out3.dtype == jnp.bfloat16
    assert jnp.allclose(out3.astype(jnp.float32), ref3.astype(jnp.float32),
                        atol=1e-2, rtol=1e-2)

    # --- Case 4: already-dense shape (B >= 8, D % 128 == 0) -> (ts, B, D) path
    d4 = 128
    pe4 = make_positional_encoding(d4, max_len=max_len)
    S4, B4 = 16, 8
    x4 = jax.random.normal(k3, (S4, B4, d4), dtype=jnp.float32)
    out4 = jax.block_until_ready(positional_encoding_forward(x4, pe4))
    ref4 = x4 + pe4[:S4]
    assert jnp.allclose(out4, ref4, atol=1e-6, rtol=1e-6)

    print("KERNEL_OK")
</pallas_src>

<mosaic_0001>
module attributes {stable_mosaic.version = 11 : i64} {
  func.func @_pe_add_lane_dense_kernel(%arg0: i32, %arg1: memref<8x64xf32, #tpu.memory_space<vmem>>, %arg2: memref<8x32xf32, #tpu.memory_space<vmem>>, %arg3: memref<8x64xf32, #tpu.memory_space<vmem>>) attributes {dimension_semantics = [#tpu.dimension_semantics<parallel>], iteration_bounds = array<i64: 1>, scalar_prefetch = 0 : i64, scratch_operands = 0 : i64, tpu.core_type = #tpu.core_type<tc>, window_params = [{transform_indices = @transform_0, window_bounds = array<i64: 8, 64>}, {transform_indices = @transform_1, window_bounds = array<i64: 8, 32>}, {transform_indices = @transform_2, window_bounds = array<i64: 8, 64>}]} {
    %c0 = arith.constant 0 : index
    %c0_0 = arith.constant 0 : index
    %0 = vector.load %arg2[%c0, %c0_0] : memref<8x32xf32, #tpu.memory_space<vmem>>, vector<8x32xf32>
    %1 = tpu.concatenate %0, %0 in 1 : vector<8x32xf32>, vector<8x32xf32> -> vector<8x64xf32>
    %c0_1 = arith.constant 0 : index
    %c0_2 = arith.constant 0 : index
    %2 = vector.load %arg1[%c0_1, %c0_2] : memref<8x64xf32, #tpu.memory_space<vmem>>, vector<8x64xf32>
    %3 = arith.addf %2, %1 : vector<8x64xf32>
    %c0_3 = arith.constant 0 : index
    %c0_4 = arith.constant 0 : index
    %4 = vector.load %arg3[%c0_3, %c0_4] : memref<8x64xf32, #tpu.memory_space<vmem>>, vector<8x64xf32>
    tpu.vector_store %arg3[%c0_3, %c0_4], %3 {strides = array<i32>} : memref<8x64xf32, #tpu.memory_space<vmem>>, vector<8x64xf32>,
    return
  }
  func.func @transform_0(%arg0: i32) -> (i32, i32) {
    %c0_i32 = arith.constant 0 : i32
    %c0_i32_0 = arith.constant 0 : i32
    return %arg0, %c0_i32 : i32, i32
  }
  func.func @transform_1(%arg0: i32) -> (i32, i32) {
    %c0_i32 = arith.constant 0 : i32
    %c0_i32_0 = arith.constant 0 : i32
    return %arg0, %c0_i32 : i32, i32
  }
  func.func @transform_2(%arg0: i32) -> (i32, i32) {
    %c0_i32 = arith.constant 0 : i32
    %c0_i32_0 = arith.constant 0 : i32
    return %arg0, %c0_i32 : i32, i32
  }
}

</mosaic_0001>

<llo_original>
// kernel: positional_encoding_forward.1
$region0: #{positional_encoding_forward.1}
  #allocation0 [shape = 'u32[]', space=smem, size = 0x4, offset = 0x4, fixed_abs, tag = 'smem constant byte address 0x4 - core index']
  #allocation1 [shape = 'u32[72,128]{1,0:T(1,128)}', space=vmem, size = 0x9000, scoped, tag = 'internal scratch']
  %s0 = inlined_call_operand.vmem [shape: f32[8,64], index: 0, kind: input, shape index: {}]
  %s1 = inlined_call_operand.vmem [shape: f32[64,32], index: 1, kind: input, shape index: {}]
  %s2 = inlined_call_operand.vmem [shape: f32[8,64], index: 2, kind: output, shape index: {}]
  %s3 = sld [smem:[#allocation0]]
  $region18: #{positional_encoding_forward.1} parent=0
    _
  %s5 = ssub.s32 1, %s3
  %s6 = scalar_select 0, %s5, %s3
  // Predicated region
  $region2: #{positional_encoding_forward.1} parent=0 // pred_check
    _
  $region3: #{positional_encoding_forward.1} parent=0 // pred_check_branch
    %8 = sbr.rel (0) target = $region5
  $region4: #{positional_encoding_forward.1} parent=0 // pred_region
    _
  $region5: #{positional_encoding_forward.1} parent=0 // pred_fallthru
    _
  // Predicated region
  $region6: #{positional_encoding_forward.1} parent=0 // pred_check
    _
  $region7: #{positional_encoding_forward.1} parent=0 // pred_check_branch
    %10 = sbr.rel (0) target = $region9
  $region8: #{positional_encoding_forward.1} parent=0 // pred_region
    _
  $region9: #{positional_encoding_forward.1} parent=0 // pred_fallthru
    _
  %v11 = vld [vmem:[%s1] sm:$0xff]
  %13 = vrot.lane.b32.xlu0 %v11, 32
  %v14 = vpop.permute.xlu0 %13
  %vm16 = vcmask 261120
  %v17 = vsel %vm16, %v11, %v14
  %v18 = vld [vmem:[%s0] sm:$0xff]
  %v19 = vadd.f32 %v18, %v17
  %vm20 = vcmask 523264
  %21 = vst.msk [vmem:[%s2] sm:$0xff] %vm20, %v19
  // Predicated region
  $region10: #{positional_encoding_forward.1} parent=0 // pred_check
    _
  $region11: #{positional_encoding_forward.1} parent=0 // pred_check_branch
    %23 = sbr.rel (0) target = $region13
  $region12: #{positional_encoding_forward.1} parent=0 // pred_region
    _
  $region13: #{positional_encoding_forward.1} parent=0 // pred_fallthru
    _
  // Predicated region
  $region14: #{positional_encoding_forward.1} parent=0 // pred_check
    _
  $region15: #{positional_encoding_forward.1} parent=0 // pred_check_branch
    %25 = sbr.rel (0) target = $region17
  $region16: #{positional_encoding_forward.1} parent=0 // pred_region
    _
  $region17: #{positional_encoding_forward.1} parent=0 // pred_fallthru
    _

</llo_original>
